<compile_context>
chip_gen: v5e
topology: v5e:2x2
jax: 0.10.0
libtpu: 0.0.40
codegen_flags: <defaults>
</compile_context>

<pallas_src>
import jax
import jax.numpy as jnp
from jax.experimental import pallas as pl
from jax.experimental.pallas import tpu as pltpu


def _round_up(x, m):
    return (x + m - 1) // m * m


def fusion_kernel(aud_ref, img_ref, w1_ref, b1_ref, w2_ref, b2_ref, out_ref):
    tb = aud_ref.shape[0]

    # Single MXU pass for the shared backbone: stack both modalities along the
    # batch axis (f32 concat is sublane-clean), cast to bf16 for the MXU,
    # accumulate in f32.
    x = jnp.concatenate([aud_ref[...], img_ref[...]], axis=0)          # [2*tb, in_dim] f32
    h = jnp.dot(x.astype(w1_ref.dtype), w1_ref[...],
                preferred_element_type=jnp.float32)                    # [2*tb, feat] f32
    h = jnp.maximum(h + b1_ref[...], 0.0)                              # f32 epilogue (VPU)

    # Additive fusion of the two modality slices.
    fused = h[:tb, :] + h[tb:, :]                                      # [tb, feat] f32

    # Classifier head (lane-dense padded output), bf16 in / f32 accumulate.
    out = jnp.dot(fused.astype(w2_ref.dtype), w2_ref[...],
                  preferred_element_type=jnp.float32) + b2_ref[...]
    out_ref[...] = out.astype(out_ref.dtype)


def basic_fusion_forward(aud, img, w1, b1, w2, b2, *, max_tile_b=512):
    B, in_dim = aud.shape
    feat_dim = w1.shape[1]
    num_classes = w2.shape[1]

    # ---- lane-dense classifier head: pad classes up to a multiple of 128 ----
    padded_c = max(128, _round_up(num_classes, 128))
    w2_p = jnp.zeros((feat_dim, padded_c), jnp.float32).at[:, :num_classes].set(w2)
    b2_p = jnp.zeros((1, padded_c), jnp.float32).at[:, :num_classes].set(b2)

    # ---- batch tiling (sublane-aligned); grid is parallel over batch ----
    tile_b = min(max_tile_b, _round_up(B, 8))
    padded_b = _round_up(B, tile_b)
    if padded_b != B:
        pad = padded_b - B
        aud = jnp.pad(aud, ((0, pad), (0, 0)))
        img = jnp.pad(img, ((0, pad), (0, 0)))

    # bf16 weights (halves weight DMA, avoids multi-pass f32 MXU emulation on
    # v6e/v7x); biases stay f32 for the f32 elementwise epilogue.
    w1_bf = w1.astype(jnp.bfloat16)
    w2_bf = w2_p.astype(jnp.bfloat16)

    grid = (padded_b // tile_b,)

    flops = 2 * (2 * padded_b * in_dim * feat_dim + padded_b * feat_dim * padded_c)
    bytes_accessed = (
        2 * padded_b * in_dim * 4            # aud + img (f32 in)
        + in_dim * feat_dim * 2              # w1 bf16
        + feat_dim * 4                       # b1 f32
        + feat_dim * padded_c * 2            # w2 bf16
        + padded_c * 4                       # b2 f32
        + padded_b * padded_c * 4            # output f32
    )

    out = pl.pallas_call(
        fusion_kernel,
        out_shape=jax.ShapeDtypeStruct((padded_b, padded_c), jnp.float32),
        grid_spec=pltpu.PrefetchScalarGridSpec(
            num_scalar_prefetch=0,
            grid=grid,
            in_specs=[
                pl.BlockSpec((tile_b, in_dim), lambda i: (i, 0)),    # aud tile
                pl.BlockSpec((tile_b, in_dim), lambda i: (i, 0)),    # img tile
                pl.BlockSpec((in_dim, feat_dim), lambda i: (0, 0)),  # w1 (replicated)
                pl.BlockSpec((1, feat_dim), lambda i: (0, 0)),       # b1 (replicated)
                pl.BlockSpec((feat_dim, padded_c), lambda i: (0, 0)),  # w2 (replicated)
                pl.BlockSpec((1, padded_c), lambda i: (0, 0)),       # b2 (replicated)
            ],
            out_specs=pl.BlockSpec((tile_b, padded_c), lambda i: (i, 0)),
        ),
        compiler_params=pltpu.CompilerParams(
            dimension_semantics=("parallel",)),
        cost_estimate=pl.CostEstimate(
            flops=flops, transcendentals=0, bytes_accessed=bytes_accessed),
    )(aud, img, w1_bf, b1, w2_bf, b2_p)

    # Strip batch padding and the lane padding of the classifier head.
    return out[:B, :num_classes]


def reference_forward(aud, img, w1, b1, w2, b2):
    # Matches the kernel's numerics: bf16 matmul operands, f32 accumulation,
    # f32 elementwise epilogue.
    w1b = w1.astype(jnp.bfloat16)
    w2b = w2.astype(jnp.bfloat16)
    aud_feat = jnp.maximum(
        jnp.dot(aud.astype(jnp.bfloat16), w1b, preferred_element_type=jnp.float32) + b1, 0.0)
    img_feat = jnp.maximum(
        jnp.dot(img.astype(jnp.bfloat16), w1b, preferred_element_type=jnp.float32) + b1, 0.0)
    x = aud_feat + img_feat
    return jnp.dot(x.astype(jnp.bfloat16), w2b, preferred_element_type=jnp.float32) + b2


if __name__ == "__main__":
    key = jax.random.PRNGKey(0)
    k_aud, k_img, k_w1, k_b1, k_w2, k_b2 = jax.random.split(key, 6)

    batch = 8
    in_dim = 32        # per-modality input feature dim
    feat_dim = 128     # backbone output dim (e.g. MLP_model.fc.in_features)
    num_classes = 16

    aud = jax.random.normal(k_aud, (batch, in_dim), dtype=jnp.float32)
    img = jax.random.normal(k_img, (batch, in_dim), dtype=jnp.float32)

    # Deterministic synthetic parameters (no checkpoint loading).
    w1 = jax.random.normal(k_w1, (in_dim, feat_dim), dtype=jnp.float32) * 0.05
    b1 = jax.random.normal(k_b1, (1, feat_dim), dtype=jnp.float32) * 0.05
    w2 = jax.random.normal(k_w2, (feat_dim, num_classes), dtype=jnp.float32) * 0.05
    b2 = jax.random.normal(k_b2, (1, num_classes), dtype=jnp.float32) * 0.05

    out = basic_fusion_forward(aud, img, w1, b1, w2, b2)
    out = jax.block_until_ready(out)

    ref = reference_forward(aud, img, w1, b1, w2, b2)
    assert out.shape == (batch, num_classes)
    assert jnp.allclose(out, ref, atol=1e-3, rtol=1e-3), (
        f"max abs err = {jnp.max(jnp.abs(out - ref))}")

    print("KERNEL_OK")
</pallas_src>

<mosaic_0001>
module attributes {stable_mosaic.version = 11 : i64} {
  func.func @fusion_kernel(%arg0: i32, %arg1: memref<8x32xf32, #tpu.memory_space<vmem>>, %arg2: memref<8x32xf32, #tpu.memory_space<vmem>>, %arg3: memref<32x128xbf16, #tpu.memory_space<vmem>>, %arg4: memref<1x128xf32, #tpu.memory_space<vmem>>, %arg5: memref<128x128xbf16, #tpu.memory_space<vmem>>, %arg6: memref<1x128xf32, #tpu.memory_space<vmem>>, %arg7: memref<8x128xf32, #tpu.memory_space<vmem>>) attributes {dimension_semantics = [#tpu.dimension_semantics<parallel>], iteration_bounds = array<i64: 1>, scalar_prefetch = 0 : i64, scratch_operands = 0 : i64, tpu.core_type = #tpu.core_type<tc>, window_params = [{transform_indices = @transform_0, window_bounds = array<i64: 8, 32>}, {transform_indices = @transform_1, window_bounds = array<i64: 8, 32>}, {pipeline_mode = #tpu.pipeline_mode<synchronous>, transform_indices = @transform_2, window_bounds = array<i64: 32, 128>}, {pipeline_mode = #tpu.pipeline_mode<synchronous>, transform_indices = @transform_3, window_bounds = array<i64: 1, 128>}, {pipeline_mode = #tpu.pipeline_mode<synchronous>, transform_indices = @transform_4, window_bounds = array<i64: 128, 128>}, {pipeline_mode = #tpu.pipeline_mode<synchronous>, transform_indices = @transform_5, window_bounds = array<i64: 1, 128>}, {transform_indices = @transform_6, window_bounds = array<i64: 8, 128>}]} {
    %c0 = arith.constant 0 : index
    %c0_0 = arith.constant 0 : index
    %0 = vector.load %arg1[%c0, %c0_0] : memref<8x32xf32, #tpu.memory_space<vmem>>, vector<8x32xf32>
    %c0_1 = arith.constant 0 : index
    %c0_2 = arith.constant 0 : index
    %1 = vector.load %arg2[%c0_1, %c0_2] : memref<8x32xf32, #tpu.memory_space<vmem>>, vector<8x32xf32>
    %2 = tpu.concatenate %0, %1 in 0 : vector<8x32xf32>, vector<8x32xf32> -> vector<16x32xf32>
    %3 = arith.truncf %2 : vector<16x32xf32> to vector<16x32xbf16>
    %c0_3 = arith.constant 0 : index
    %c0_4 = arith.constant 0 : index
    %4 = vector.load %arg3[%c0_3, %c0_4] : memref<32x128xbf16, #tpu.memory_space<vmem>>, vector<32x128xbf16>
    %cst = arith.constant dense<0.000000e+00> : vector<16x128xf32>
    %5 = tpu.matmul %3, %4, %cst {dimension_numbers = #tpu.dot_dimension_numbers<[1], [0], [0], [1], [0, 0, 1, 1], [], []>} : vector<16x32xbf16>, vector<32x128xbf16>, vector<16x128xf32> -> vector<16x128xf32>
    %c0_5 = arith.constant 0 : index
    %c0_6 = arith.constant 0 : index
    %6 = vector.load %arg4[%c0_5, %c0_6] : memref<1x128xf32, #tpu.memory_space<vmem>>, vector<1x128xf32>
    %7 = vector.broadcast %6 : vector<1x128xf32> to vector<16x128xf32>
    %8 = arith.addf %5, %7 : vector<16x128xf32>
    %cst_7 = arith.constant 0.000000e+00 : f32
    %9 = vector.broadcast %cst_7 : f32 to vector<16x128xf32>
    %10 = arith.maximumf %8, %9 : vector<16x128xf32>
    %11 = vector.extract_strided_slice %10 {offsets = [0, 0], sizes = [8, 128], strides = [1, 1]} : vector<16x128xf32> to vector<8x128xf32>
    %12 = vector.extract_strided_slice %10 {offsets = [8, 0], sizes = [8, 128], strides = [1, 1]} : vector<16x128xf32> to vector<8x128xf32>
    %13 = arith.addf %11, %12 : vector<8x128xf32>
    %14 = arith.truncf %13 : vector<8x128xf32> to vector<8x128xbf16>
    %c0_8 = arith.constant 0 : index
    %c0_9 = arith.constant 0 : index
    %15 = vector.load %arg5[%c0_8, %c0_9] : memref<128x128xbf16, #tpu.memory_space<vmem>>, vector<128x128xbf16>
    %cst_10 = arith.constant dense<0.000000e+00> : vector<8x128xf32>
    %16 = tpu.matmul %14, %15, %cst_10 {dimension_numbers = #tpu.dot_dimension_numbers<[1], [0], [0], [1], [0, 0, 1, 1], [], []>} : vector<8x128xbf16>, vector<128x128xbf16>, vector<8x128xf32> -> vector<8x128xf32>
    %c0_11 = arith.constant 0 : index
    %c0_12 = arith.constant 0 : index
    %17 = vector.load %arg6[%c0_11, %c0_12] : memref<1x128xf32, #tpu.memory_space<vmem>>, vector<1x128xf32>
    %18 = vector.broadcast %17 : vector<1x128xf32> to vector<8x128xf32>
    %19 = arith.addf %16, %18 : vector<8x128xf32>
    %c0_13 = arith.constant 0 : index
    %c0_14 = arith.constant 0 : index
    %20 = vector.load %arg7[%c0_13, %c0_14] : memref<8x128xf32, #tpu.memory_space<vmem>>, vector<8x128xf32>
    tpu.vector_store %arg7[%c0_13, %c0_14], %19 {strides = array<i32>} : memref<8x128xf32, #tpu.memory_space<vmem>>, vector<8x128xf32>,
    return
  }
  func.func @transform_0(%arg0: i32) -> (i32, i32) {
    %c0_i32 = arith.constant 0 : i32
    %c0_i32_0 = arith.constant 0 : i32
    return %arg0, %c0_i32 : i32, i32
  }
  func.func @transform_1(%arg0: i32) -> (i32, i32) {
    %c0_i32 = arith.constant 0 : i32
    %c0_i32_0 = arith.constant 0 : i32
    return %arg0, %c0_i32 : i32, i32
  }
  func.func @transform_2(%arg0: i32) -> (i32, i32) {
    %c0_i32 = arith.constant 0 : i32
    %c0_i32_0 = arith.constant 0 : i32
    %c0_i32_1 = arith.constant 0 : i32
    return %c0_i32, %c0_i32_0 : i32, i32
  }
  func.func @transform_3(%arg0: i32) -> (i32, i32) {
    %c0_i32 = arith.constant 0 : i32
    %c0_i32_0 = arith.constant 0 : i32
    %c0_i32_1 = arith.constant 0 : i32
    return %c0_i32, %c0_i32_0 : i32, i32
  }
  func.func @transform_4(%arg0: i32) -> (i32, i32) {
    %c0_i32 = arith.constant 0 : i32
    %c0_i32_0 = arith.constant 0 : i32
    %c0_i32_1 = arith.constant 0 : i32
    return %c0_i32, %c0_i32_0 : i32, i32
  }
  func.func @transform_5(%arg0: i32) -> (i32, i32) {
    %c0_i32 = arith.constant 0 : i32
    %c0_i32_0 = arith.constant 0 : i32
    %c0_i32_1 = arith.constant 0 : i32
    return %c0_i32, %c0_i32_0 : i32, i32
  }
  func.func @transform_6(%arg0: i32) -> (i32, i32) {
    %c0_i32 = arith.constant 0 : i32
    %c0_i32_0 = arith.constant 0 : i32
    return %arg0, %c0_i32 : i32, i32
  }
}

</mosaic_0001>

<llo_original>
// kernel: tpu_custom_call.1
$region0: #{tpu_custom_call.1}
  #allocation0 [shape = 'u32[]', space=smem, size = 0x4, offset = 0x4, fixed_abs, tag = 'smem constant byte address 0x4 - core index']
  #allocation1 [shape = 'u32[72,128]{1,0:T(1,128)}', space=vmem, size = 0x9000, scoped, tag = 'internal scratch']
  %s0 = inlined_call_operand.hbm [shape: f32[8,32], index: 0, kind: input, shape index: {}]
  %s1 = inlined_call_operand.hbm [shape: f32[8,32], index: 1, kind: input, shape index: {}]
  %s2 = inlined_call_operand.hbm [shape: bf16[32,128], index: 2, kind: input, shape index: {}]
  %s3 = inlined_call_operand.vmem [shape: f32[1,128], index: 3, kind: input, shape index: {}]
  %s4 = inlined_call_operand.hbm [shape: bf16[128,128], index: 4, kind: input, shape index: {}]
  %s5 = inlined_call_operand.vmem [shape: f32[1,128], index: 5, kind: input, shape index: {}]
  %s6 = inlined_call_operand.hbm [shape: f32[8,128], index: 6, kind: output, shape index: {}]
  %s7 = sld [smem:[#allocation0]]
  $region50: #{tpu_custom_call.1} parent=0
    _
  %s9 = ssub.s32 1, %s7
  %s10 = scalar_select 0, %s9, %s7
  $region1: #{tpu_custom_call.1} parent=0
    #allocation2 [shape = 'u8[4096]{0}', space=vmem, size = 0x1000, scoped, tag = 'input window, operand 0, single buffered']
    #allocation3 [shape = 's32[1]{0}', space=sflag, size = 0x4, scoped, tag = 'scoped memory for tpu_custom_call.1']
    #allocation4 [shape = 's32[1]{0}', space=sflag, size = 0x4, scoped, tag = 'scoped memory for tpu_custom_call.1']
    #allocation5 [shape = 'u8[4096]{0}', space=vmem, size = 0x1000, scoped, tag = 'input window, operand 1, single buffered']
    #allocation6 [shape = 's32[1]{0}', space=sflag, size = 0x4, scoped, tag = 'scoped memory for tpu_custom_call.1']
    #allocation7 [shape = 'u8[8192]{0}', space=vmem, size = 0x2000, scoped, tag = 'input window, operand 2, single buffered']
    #allocation8 [shape = 'u8[32768]{0}', space=vmem, size = 0x8000, scoped, tag = 'input window, operand 4, single buffered']
    #allocation9 [shape = 's32[1]{0}', space=sflag, size = 0x4, scoped, tag = 'scoped memory for tpu_custom_call.1']
    #allocation10 [shape = 'u8[4096]{0}', space=vmem, size = 0x1000, scoped, tag = 'output window, operand 0, single buffered']
    %11 = vsyncpa [#allocation3], 0
    %12 = vsyncpa [#allocation6], 0
    %13 = vsyncpa [#allocation9], 0
    %14 = vsyncpa [#allocation4], 0
    // Predicated region
    $region2: #{tpu_custom_call.1} parent=1 // pred_check
      _
    $region3: #{tpu_custom_call.1} parent=1 // pred_check_branch
      %16 = sbr.rel (0) target = $region5
    $region4: #{tpu_custom_call.1} parent=1 // pred_region
      %18 = vsyncadd [#allocation3], 0
      %s20 = sshll.u32 %s0, 4
      %s21 = int_to_ptr.hbm [resolvable:$true] %s20
      %s22 = sshll.u32 [#allocation2], 4
      %s23 = int_to_ptr.vmem [resolvable:$true] %s22
      %25 = dma.hbm_to_vmem [thread:$0]  %s21, 128, %s23, [#allocation3]
    $region5: #{tpu_custom_call.1} parent=1 // pred_fallthru
      _
    // Predicated region
    $region6: #{tpu_custom_call.1} parent=1 // pred_check
      _
    $region7: #{tpu_custom_call.1} parent=1 // pred_check_branch
      %27 = sbr.rel (0) target = $region9
    $region8: #{tpu_custom_call.1} parent=1 // pred_region
      %29 = vsyncadd [#allocation6], 0
      %s31 = sshll.u32 %s1, 4
      %s32 = int_to_ptr.hbm [resolvable:$true] %s31
      %s33 = sshll.u32 [#allocation5], 4
      %s34 = int_to_ptr.vmem [resolvable:$true] %s33
      %36 = dma.hbm_to_vmem [thread:$0]  %s32, 128, %s34, [#allocation6]
    $region9: #{tpu_custom_call.1} parent=1 // pred_fallthru
      _
    // Predicated region
    $region10: #{tpu_custom_call.1} parent=1 // pred_check
      _
    $region11: #{tpu_custom_call.1} parent=1 // pred_check_branch
      %38 = sbr.rel (0) target = $region13
    $region12: #{tpu_custom_call.1} parent=1 // pred_region
      %40 = vsyncadd [#allocation6], 0
      %s41 = sshll.u32 %s2, 4
      %s42 = int_to_ptr.hbm [resolvable:$true] %s41
      %s43 = sshll.u32 [#allocation7], 4
      %s44 = int_to_ptr.vmem [resolvable:$true] %s43
      %49 = dma.hbm_to_vmem [thread:$0]  %s42, 256, %s44, [#allocation6], 64, 64, 4
    $region13: #{tpu_custom_call.1} parent=1 // pred_fallthru
      _
    // Predicated region
    $region14: #{tpu_custom_call.1} parent=1 // pred_check
      _
    $region15: #{tpu_custom_call.1} parent=1 // pred_check_branch
      %51 = sbr.rel (0) target = $region17
    $region16: #{tpu_custom_call.1} parent=1 // pred_region
      _
    $region17: #{tpu_custom_call.1} parent=1 // pred_fallthru
      _
    // Predicated region
    $region18: #{tpu_custom_call.1} parent=1 // pred_check
      _
    $region19: #{tpu_custom_call.1} parent=1 // pred_check_branch
      %53 = sbr.rel (0) target = $region21
    $region20: #{tpu_custom_call.1} parent=1 // pred_region
      %55 = vsyncadd [#allocation9], 0
      %s56 = sshll.u32 %s4, 4
      %s57 = int_to_ptr.hbm [resolvable:$true] %s56
      %s58 = sshll.u32 [#allocation8], 4
      %s59 = int_to_ptr.vmem [resolvable:$true] %s58
      %64 = dma.hbm_to_vmem [thread:$0]  %s57, 1024, %s59, [#allocation9], 64, 64, 4
    $region21: #{tpu_custom_call.1} parent=1 // pred_fallthru
      _
    // Predicated region
    $region22: #{tpu_custom_call.1} parent=1 // pred_check
      _
    $region23: #{tpu_custom_call.1} parent=1 // pred_check_branch
      %66 = sbr.rel (0) target = $region25
    $region24: #{tpu_custom_call.1} parent=1 // pred_region
      _
    $region25: #{tpu_custom_call.1} parent=1 // pred_fallthru
      _
    // Predicated region
    $region26: #{tpu_custom_call.1} parent=1 // pred_check
      _
    $region27: #{tpu_custom_call.1} parent=1 // pred_check_branch
      %68 = sbr.rel (0) target = $region29
    $region28: #{tpu_custom_call.1} parent=1 // pred_region
      %70 = dma.done [#allocation3], 128
    $region29: #{tpu_custom_call.1} parent=1 // pred_fallthru
      _
    // Predicated region
    $region30: #{tpu_custom_call.1} parent=1 // pred_check
      _
    $region31: #{tpu_custom_call.1} parent=1 // pred_check_branch
      %72 = sbr.rel (0) target = $region33
    $region32: #{tpu_custom_call.1} parent=1 // pred_region
      %74 = dma.done [#allocation6], 128
    $region33: #{tpu_custom_call.1} parent=1 // pred_fallthru
      _
    // Predicated region
    $region34: #{tpu_custom_call.1} parent=1 // pred_check
      _
    $region35: #{tpu_custom_call.1} parent=1 // pred_check_branch
      %76 = sbr.rel (0) target = $region37
    $region36: #{tpu_custom_call.1} parent=1 // pred_region
      %78 = dma.done [#allocation6], 256
    $region37: #{tpu_custom_call.1} parent=1 // pred_fallthru
      _
    // Predicated region
    $region38: #{tpu_custom_call.1} parent=1 // pred_check
      _
    $region39: #{tpu_custom_call.1} parent=1 // pred_check_branch
      %80 = sbr.rel (0) target = $region41
    $region40: #{tpu_custom_call.1} parent=1 // pred_region
      %82 = dma.done [#allocation9], 1024
    $region41: #{tpu_custom_call.1} parent=1 // pred_fallthru
      _
    %v84 = vld [vmem:[#allocation2] sm:$0xff]
    %v85 = vld [vmem:[#allocation5] sm:$0xff]
    %v86 = vpack.c.bf16 %v85, %v84
    %v87 = vld [vmem:[#allocation7] sm:$0xf]
    %v88 = vld [vmem:[#allocation7 + $0x4] sm:$0xf]
    %v89 = vld [vmem:[#allocation7 + $0x8] sm:$0xf]
    %v90 = vld [vmem:[#allocation7 + $0xc] sm:$0xf]
    %v91 = vld [vmem:[%s3] sm:$0x1]
    %v93 = vperm.slane %v91, 0
    %v99 = vunpack.c.l.b16 %v87
    %v100 = vunpack.c.l.b16 %v88
    %v101 = vunpack.c.l.b16 %v89
    %v102 = vunpack.c.l.b16 %v90
    %v103 = vpack.c.b16 %v100, %v99
    %v104 = vpack.c.b16 %v102, %v101
    %vm107 = vcmask 261120
    %v109 = vsel %vm107, %v86, 0
    %111 = vmatpush.bf16.msra.mxu0 0
    %112 = vmatpush.bf16.msra.mxu0 0
    %113 = vmatpush.bf16.msra.mxu0 0
    %114 = vmatpush.bf16.msra.mxu0 0
    %115 = vmatpush.bf16.msra.mxu0 0
    %116 = vmatpush.bf16.msra.mxu0 0
    %117 = vmatpush.bf16.msra.mxu0 %v104
    %118 = vmatpush.bf16.msra.mxu0 %v103
    %119 = vmatmul.bf16.gmra.mxu0 %v109
    %v120 = vpop.f32.mrf.mxu0
    %v121 = vadd.f32 %v93, %v120
    %v122 = vpop.f32.mrf.mxu0
    %v123 = vadd.f32 %v93, %v122
    %124 = vdwg.mxu0
    %v125 = vmax.f32 %v121, 0.0
    %v126 = vmax.f32 %v123, 0.0
    %v127 = vadd.f32 %v125, %v126
    %v128 = vpack.c.bf16 %v127, %v127
    %v129 = vld [vmem:[#allocation8] sm:$0xf]
    %v130 = vld [vmem:[#allocation8 + $0x4] sm:$0xf]
    %v131 = vld [vmem:[#allocation8 + $0x8] sm:$0xf]
    %v132 = vld [vmem:[#allocation8 + $0xc] sm:$0xf]
    %v133 = vld [vmem:[#allocation8 + $0x10] sm:$0xf]
    %v134 = vld [vmem:[#allocation8 + $0x14] sm:$0xf]
    %v135 = vld [vmem:[#allocation8 + $0x18] sm:$0xf]
    %v136 = vld [vmem:[#allocation8 + $0x1c] sm:$0xf]
    %v137 = vld [vmem:[#allocation8 + $0x20] sm:$0xf]
    %v138 = vld [vmem:[#allocation8 + $0x24] sm:$0xf]
    %v139 = vld [vmem:[#allocation8 + $0x28] sm:$0xf]
    %v140 = vld [vmem:[#allocation8 + $0x2c] sm:$0xf]
    %v141 = vld [vmem:[#allocation8 + $0x30] sm:$0xf]
    %v142 = vld [vmem:[#allocation8 + $0x34] sm:$0xf]
    %v143 = vld [vmem:[#allocation8 + $0x38] sm:$0xf]
    %v144 = vld [vmem:[#allocation8 + $0x3c] sm:$0xf]
    %v145 = vld [vmem:[%s5] sm:$0x1]
    %v147 = vperm.slane %v145, 0
    %v165 = vunpack.c.l.b16 %v129
    %v166 = vunpack.c.l.b16 %v130
    %v167 = vunpack.c.l.b16 %v131
    %v168 = vunpack.c.l.b16 %v132
    %v169 = vunpack.c.l.b16 %v133
    %v170 = vunpack.c.l.b16 %v134
    %v171 = vunpack.c.l.b16 %v135
    %v172 = vunpack.c.l.b16 %v136
    %v173 = vunpack.c.l.b16 %v137
    %v174 = vunpack.c.l.b16 %v138
    %v175 = vunpack.c.l.b16 %v139
    %v176 = vunpack.c.l.b16 %v140
    %v177 = vunpack.c.l.b16 %v141
    %v178 = vunpack.c.l.b16 %v142
    %v179 = vunpack.c.l.b16 %v143
    %v180 = vunpack.c.l.b16 %v144
    %v181 = vpack.c.b16 %v166, %v165
    %v182 = vpack.c.b16 %v168, %v167
    %v183 = vpack.c.b16 %v170, %v169
    %v184 = vpack.c.b16 %v172, %v171
    %v185 = vpack.c.b16 %v174, %v173
    %v186 = vpack.c.b16 %v176, %v175
    %v187 = vpack.c.b16 %v178, %v177
    %v188 = vpack.c.b16 %v180, %v179
    %197 = vmatpush.bf16.msra.mxu0 %v188
    %198 = vmatpush.bf16.msra.mxu0 %v187
    %199 = vmatpush.bf16.msra.mxu0 %v186
    %200 = vmatpush.bf16.msra.mxu0 %v185
    %201 = vmatpush.bf16.msra.mxu0 %v184
    %202 = vmatpush.bf16.msra.mxu0 %v183
    %203 = vmatpush.bf16.msra.mxu0 %v182
    %204 = vmatpush.bf16.msra.mxu0 %v181
    %205 = vmatmul.bf16.gmra.mxu0 %v128
    %v206 = vpop.f32.mrf.mxu0
    %v207 = vadd.f32 %v147, %v206
    %v208 = vpop.f32.mrf.mxu0
    %209 = vdwg.mxu0
    %210 = vst [vmem:[#allocation10] sm:$0xff] %v207
    // Predicated region
    $region42: #{tpu_custom_call.1} parent=1 // pred_check
      _
    $region43: #{tpu_custom_call.1} parent=1 // pred_check_branch
      %212 = sbr.rel (0) target = $region45
    $region44: #{tpu_custom_call.1} parent=1 // pred_region
      %214 = vsyncadd [#allocation4], 0
      %s216 = sshll.u32 [#allocation10], 4
      %s217 = int_to_ptr.vmem [resolvable:$true] %s216
      %s218 = sshll.u32 %s6, 4
      %s219 = int_to_ptr.hbm [resolvable:$true] %s218
      %221 = dma.vmem_to_hbm [thread:$0]  %s217, 128, %s219, [#allocation4]
    $region45: #{tpu_custom_call.1} parent=1 // pred_fallthru
      _
    // Predicated region
    $region46: #{tpu_custom_call.1} parent=1 // pred_check
      _
    $region47: #{tpu_custom_call.1} parent=1 // pred_check_branch
      %223 = sbr.rel (0) target = $region49
    $region48: #{tpu_custom_call.1} parent=1 // pred_region
      %225 = dma.done [#allocation4], 128
    $region49: #{tpu_custom_call.1} parent=1 // pred_fallthru
      _
    %226 = vsyncpa [#allocation3], 1
    %227 = vsyncpa [#allocation6], 1
    %228 = vsyncpa [#allocation9], 1
    %229 = vsyncpa [#allocation4], 1

</llo_original>
